<compile_context>
chip_gen: v6e
topology: v6e:2x2x1
jax: 0.10.0
libtpu: 0.0.40
codegen_flags: <defaults>
</compile_context>

<pallas_src>
import jax
import jax.numpy as jnp
from jax.experimental import pallas as pl
from jax.experimental.pallas import tpu as pltpu

NEG_SLOPE = 0.01  # nn.LeakyReLU default negative_slope
LANE = 128


def _leaky_relu(x):
    # 1 vmul + 1 vmax per vreg.
    return jnp.maximum(x, NEG_SLOPE * x)


def mlp_kernel(x_ref, w1_ref, b1_ref, w2_ref, b2_ref, w3_ref, b3_ref, o_ref):
    # Hot path: two bf16 MXU matmuls (f32 accumulation) + f32 VPU epilogue.
    x = x_ref[...]                                                   # (TB, K) bf16
    h1 = jnp.dot(x, w1_ref[...], preferred_element_type=jnp.float32)
    h1 = _leaky_relu(h1 + b1_ref[...])                               # f32
    h2 = jnp.dot(h1.astype(w2_ref.dtype), w2_ref[...],
                 preferred_element_type=jnp.float32)
    h2 = _leaky_relu(h2 + b2_ref[...])                               # f32
    # Head (hidden -> 1): VPU multiply + cross-lane (XLU) reduction, then one
    # sublane->lane transpose so the store is a lane-dense (1, TB) row.
    o = jnp.sum(h2 * w3_ref[...], axis=-1, keepdims=True) + b3_ref[0, 0]  # (TB, 1)
    o_ref[...] = o.reshape(o_ref.shape).astype(o_ref.dtype)


def _round_up(n, m):
    return ((n + m - 1) // m) * m


def _pad2(a, rows, cols):
    r, c = a.shape
    if r == rows and c == cols:
        return a
    return jnp.pad(a, ((0, rows - r), (0, cols - c)))


def age_predictor_mlp(x, w1, b1, w2, b2, w3_row, b3, *,
                      tb_max=512, param_dtype=jnp.bfloat16):
    """x: (B, input_size) f32.  Weights stored (in, out).  Returns (B, 1) f32."""
    B, K = x.shape
    H = w1.shape[1]

    # ---- batch tiling: balanced tiles, >=2 when the batch allows (v7x 2 TCs) ----
    num_tiles = pl.cdiv(B, tb_max)
    if num_tiles == 1 and B > 8:
        num_tiles = 2
    TB = _round_up(pl.cdiv(B, num_tiles), 16)   # 16: bf16 sublane packing
    B_pad = TB * num_tiles

    # ---- MXU-friendly dim padding (zeros are exact through the whole net) -------
    # TODO(synk): in production pad the weights once at init instead of per call.
    K_pad = _round_up(K, LANE)
    H_pad = _round_up(H, LANE)
    x_p = _pad2(x, B_pad, K_pad).astype(param_dtype)
    w1_p = _pad2(w1, K_pad, H_pad).astype(param_dtype)
    w2_p = _pad2(w2, H_pad, H_pad).astype(param_dtype)
    b1_p = _pad2(b1, 1, H_pad).astype(jnp.float32)
    b2_p = _pad2(b2, 1, H_pad).astype(jnp.float32)
    w3_p = _pad2(w3_row, 1, H_pad).astype(jnp.float32)
    b3_p = b3.reshape(1, 1).astype(jnp.float32)

    itemsize = jnp.dtype(param_dtype).itemsize

    def build(single_buffer_weights):
        def resident(shape):
            # Constant index_map -> block stays VMEM-resident (never re-DMAed).
            # Buffered(1) drops the useless second pipeline buffer (v7x VMEM).
            if single_buffer_weights:
                return pl.BlockSpec(shape, lambda i: (0, 0),
                                    pipeline_mode=pl.Buffered(1))
            return pl.BlockSpec(shape, lambda i: (0, 0))

        wbuf = 1 if single_buffer_weights else 2
        vmem_bytes = (
            2 * TB * K_pad * itemsize                              # x tile (x2 bufs)
            + wbuf * (K_pad * H_pad + H_pad * H_pad) * itemsize    # w1, w2
            + wbuf * 3 * H_pad * 4                                 # b1, b2, w3 (f32)
            + 2 * TB * 4                                           # output row
        )
        vmem_limit = int(min(96 << 20, max(2 * vmem_bytes, 8 << 20)))
        # TODO(synk): if K_pad*H_pad or H_pad*H_pad alone nears v7x's 64 MiB VMEM,
        # switch layer 1 to a K-reduction grid axis instead of a fully-resident w1.
        # TODO(synk): on v5e with very large K, bump the x spec to pl.Buffered(3).

        return pl.pallas_call(
            mlp_kernel,
            out_shape=jax.ShapeDtypeStruct((num_tiles, TB), jnp.float32),
            grid=(num_tiles,),
            in_specs=[
                pl.BlockSpec((TB, K_pad), lambda i: (i, 0)),        # x: streamed
                resident((K_pad, H_pad)),                           # w1
                resident((1, H_pad)),                               # b1
                resident((H_pad, H_pad)),                           # w2
                resident((1, H_pad)),                               # b2
                resident((1, H_pad)),                               # w3 row
                pl.BlockSpec(memory_space=pltpu.MemorySpace.SMEM),  # b3 scalar
            ],
            out_specs=pl.BlockSpec((1, TB), lambda i: (i, 0)),      # lane-dense rows
            compiler_params=pltpu.CompilerParams(
                dimension_semantics=("parallel",),
                vmem_limit_bytes=vmem_limit,
            ),
        )

    args = (x_p, w1_p, b1_p, w2_p, b2_p, w3_p, b3_p)
    try:
        out = build(True)(*args)
    except Exception:
        # pipeline_mode=pl.Buffered(1) not supported on this JAX/Mosaic build:
        # fall back to the default double-buffered resident weights.
        out = build(False)(*args)

    return out.reshape(B_pad, 1)[:B]


def init_params(key, input_size, hidden_size):
    """Deterministic init mimicking nn.Linear's uniform(-1/sqrt(fan_in), +...)."""
    ks = jax.random.split(key, 6)

    def linear(kw, kb, fan_in, fan_out):
        bound = 1.0 / jnp.sqrt(jnp.float32(fan_in))
        # stored as (in, out) — transposed relative to PyTorch's (out, in)
        w = jax.random.uniform(kw, (fan_in, fan_out), jnp.float32, -bound, bound)
        b = jax.random.uniform(kb, (1, fan_out), jnp.float32, -bound, bound)
        return w, b

    w1, b1 = linear(ks[0], ks[1], input_size, hidden_size)
    w2, b2 = linear(ks[2], ks[3], hidden_size, hidden_size)
    w3, b3 = linear(ks[4], ks[5], hidden_size, 1)
    # Final layer stored as a (1, hidden) row for the in-kernel VPU reduction.
    return w1, b1, w2, b2, w3.T, b3.reshape(1, 1)


def reference_forward(x, w1, b1, w2, b2, w3_row, b3, storage_dtype=jnp.float32):
    """Pure-JAX reference.  storage_dtype=bfloat16 mirrors the kernel's numerics
    (bf16 storage / f32 accumulation); float32 is the exact module math."""
    c = lambda a: a.astype(storage_dtype)
    h1 = _leaky_relu(jnp.dot(c(x), c(w1), preferred_element_type=jnp.float32) + b1)
    h2 = _leaky_relu(jnp.dot(c(h1), c(w2), preferred_element_type=jnp.float32) + b2)
    return jnp.sum(h2 * w3_row, axis=-1, keepdims=True) + b3


if __name__ == "__main__":
    batch, input_size, hidden_size = 8, 16, 32

    key = jax.random.PRNGKey(0)
    k_x, k_p = jax.random.split(key)
    x = jax.random.normal(k_x, (batch, input_size), jnp.float32)
    params = init_params(k_p, input_size, hidden_size)

    out = jax.block_until_ready(age_predictor_mlp(x, *params))
    assert out.shape == (batch, 1)

    # Tight check against a reference using the same bf16-storage / f32-accum math.
    ref_bf16 = reference_forward(x, *params, storage_dtype=jnp.bfloat16)
    assert jnp.allclose(out, ref_bf16, atol=2e-2, rtol=2e-2), float(
        jnp.max(jnp.abs(out - ref_bf16)))
    # Loose sanity check against the exact float32 module math.
    ref_f32 = reference_forward(x, *params, storage_dtype=jnp.float32)
    assert jnp.allclose(out, ref_f32, atol=1e-1, rtol=1e-1)

    print("KERNEL_OK")
</pallas_src>

<mosaic_0001>
module attributes {stable_mosaic.version = 11 : i64} {
  func.func @mlp_kernel(%arg0: i32, %arg1: memref<16x128xbf16, #tpu.memory_space<vmem>>, %arg2: memref<128x128xbf16, #tpu.memory_space<vmem>>, %arg3: memref<1x128xf32, #tpu.memory_space<vmem>>, %arg4: memref<128x128xbf16, #tpu.memory_space<vmem>>, %arg5: memref<1x128xf32, #tpu.memory_space<vmem>>, %arg6: memref<1x128xf32, #tpu.memory_space<vmem>>, %arg7: memref<1x1xf32, #tpu.memory_space<smem>>, %arg8: memref<1x16xf32, #tpu.memory_space<vmem>>) attributes {dimension_semantics = [#tpu.dimension_semantics<parallel>], iteration_bounds = array<i64: 1>, scalar_prefetch = 0 : i64, scratch_operands = 0 : i64, tpu.core_type = #tpu.core_type<tc>, window_params = [{transform_indices = @transform_0, window_bounds = array<i64: 16, 128>}, {pipeline_mode = #tpu.pipeline_mode<synchronous>, transform_indices = @transform_1, window_bounds = array<i64: 128, 128>}, {pipeline_mode = #tpu.pipeline_mode<synchronous>, transform_indices = @transform_2, window_bounds = array<i64: 1, 128>}, {pipeline_mode = #tpu.pipeline_mode<synchronous>, transform_indices = @transform_3, window_bounds = array<i64: 128, 128>}, {pipeline_mode = #tpu.pipeline_mode<synchronous>, transform_indices = @transform_4, window_bounds = array<i64: 1, 128>}, {pipeline_mode = #tpu.pipeline_mode<synchronous>, transform_indices = @transform_5, window_bounds = array<i64: 1, 128>}, {transform_indices = @transform_6, window_bounds = array<i64: 1, 1>}, {transform_indices = @transform_7, window_bounds = array<i64: 1, 16>}]} {
    %c0 = arith.constant 0 : index
    %c0_0 = arith.constant 0 : index
    %0 = vector.load %arg1[%c0, %c0_0] : memref<16x128xbf16, #tpu.memory_space<vmem>>, vector<16x128xbf16>
    %c0_1 = arith.constant 0 : index
    %c0_2 = arith.constant 0 : index
    %1 = vector.load %arg2[%c0_1, %c0_2] : memref<128x128xbf16, #tpu.memory_space<vmem>>, vector<128x128xbf16>
    %cst = arith.constant dense<0.000000e+00> : vector<16x128xf32>
    %2 = tpu.matmul %0, %1, %cst {dimension_numbers = #tpu.dot_dimension_numbers<[1], [0], [0], [1], [0, 0, 1, 1], [], []>} : vector<16x128xbf16>, vector<128x128xbf16>, vector<16x128xf32> -> vector<16x128xf32>
    %c0_3 = arith.constant 0 : index
    %c0_4 = arith.constant 0 : index
    %3 = vector.load %arg3[%c0_3, %c0_4] : memref<1x128xf32, #tpu.memory_space<vmem>>, vector<1x128xf32>
    %4 = vector.broadcast %3 : vector<1x128xf32> to vector<16x128xf32>
    %5 = arith.addf %2, %4 : vector<16x128xf32>
    %cst_5 = arith.constant 0.00999999977 : f32
    %6 = vector.broadcast %cst_5 : f32 to vector<16x128xf32>
    %7 = arith.mulf %6, %5 : vector<16x128xf32>
    %8 = arith.maximumf %5, %7 : vector<16x128xf32>
    %9 = arith.truncf %8 : vector<16x128xf32> to vector<16x128xbf16>
    %c0_6 = arith.constant 0 : index
    %c0_7 = arith.constant 0 : index
    %10 = vector.load %arg4[%c0_6, %c0_7] : memref<128x128xbf16, #tpu.memory_space<vmem>>, vector<128x128xbf16>
    %cst_8 = arith.constant dense<0.000000e+00> : vector<16x128xf32>
    %11 = tpu.matmul %9, %10, %cst_8 {dimension_numbers = #tpu.dot_dimension_numbers<[1], [0], [0], [1], [0, 0, 1, 1], [], []>} : vector<16x128xbf16>, vector<128x128xbf16>, vector<16x128xf32> -> vector<16x128xf32>
    %c0_9 = arith.constant 0 : index
    %c0_10 = arith.constant 0 : index
    %12 = vector.load %arg5[%c0_9, %c0_10] : memref<1x128xf32, #tpu.memory_space<vmem>>, vector<1x128xf32>
    %13 = vector.broadcast %12 : vector<1x128xf32> to vector<16x128xf32>
    %14 = arith.addf %11, %13 : vector<16x128xf32>
    %cst_11 = arith.constant 0.00999999977 : f32
    %15 = vector.broadcast %cst_11 : f32 to vector<16x128xf32>
    %16 = arith.mulf %15, %14 : vector<16x128xf32>
    %17 = arith.maximumf %14, %16 : vector<16x128xf32>
    %c0_12 = arith.constant 0 : index
    %c0_13 = arith.constant 0 : index
    %18 = vector.load %arg6[%c0_12, %c0_13] : memref<1x128xf32, #tpu.memory_space<vmem>>, vector<1x128xf32>
    %19 = vector.broadcast %18 : vector<1x128xf32> to vector<16x128xf32>
    %20 = arith.mulf %17, %19 : vector<16x128xf32>
    %cst_14 = arith.constant dense<0.000000e+00> : vector<16xf32>
    %21 = vector.multi_reduction <add>, %20, %cst_14 [1] : vector<16x128xf32> to vector<16xf32>
    %22 = vector.shape_cast %21 : vector<16xf32> to vector<16x1xf32>
    %c0_15 = arith.constant 0 : index
    %c0_16 = arith.constant 0 : index
    %23 = memref.load %arg7[%c0_15, %c0_16] : memref<1x1xf32, #tpu.memory_space<smem>>
    %24 = vector.broadcast %23 : f32 to vector<16x1xf32>
    %25 = arith.addf %22, %24 : vector<16x1xf32>
    %26 = vector.shape_cast %25 : vector<16x1xf32> to vector<1x16xf32>
    %c0_17 = arith.constant 0 : index
    %c0_18 = arith.constant 0 : index
    %27 = vector.load %arg8[%c0_17, %c0_18] : memref<1x16xf32, #tpu.memory_space<vmem>>, vector<1x16xf32>
    tpu.vector_store %arg8[%c0_17, %c0_18], %26 {strides = array<i32>} : memref<1x16xf32, #tpu.memory_space<vmem>>, vector<1x16xf32>,
    return
  }
  func.func @transform_0(%arg0: i32) -> (i32, i32) {
    %c0_i32 = arith.constant 0 : i32
    %c0_i32_0 = arith.constant 0 : i32
    return %arg0, %c0_i32 : i32, i32
  }
  func.func @transform_1(%arg0: i32) -> (i32, i32) {
    %c0_i32 = arith.constant 0 : i32
    %c0_i32_0 = arith.constant 0 : i32
    %c0_i32_1 = arith.constant 0 : i32
    return %c0_i32, %c0_i32_0 : i32, i32
  }
  func.func @transform_2(%arg0: i32) -> (i32, i32) {
    %c0_i32 = arith.constant 0 : i32
    %c0_i32_0 = arith.constant 0 : i32
    %c0_i32_1 = arith.constant 0 : i32
    return %c0_i32, %c0_i32_0 : i32, i32
  }
  func.func @transform_3(%arg0: i32) -> (i32, i32) {
    %c0_i32 = arith.constant 0 : i32
    %c0_i32_0 = arith.constant 0 : i32
    %c0_i32_1 = arith.constant 0 : i32
    return %c0_i32, %c0_i32_0 : i32, i32
  }
  func.func @transform_4(%arg0: i32) -> (i32, i32) {
    %c0_i32 = arith.constant 0 : i32
    %c0_i32_0 = arith.constant 0 : i32
    %c0_i32_1 = arith.constant 0 : i32
    return %c0_i32, %c0_i32_0 : i32, i32
  }
  func.func @transform_5(%arg0: i32) -> (i32, i32) {
    %c0_i32 = arith.constant 0 : i32
    %c0_i32_0 = arith.constant 0 : i32
    %c0_i32_1 = arith.constant 0 : i32
    return %c0_i32, %c0_i32_0 : i32, i32
  }
  func.func @transform_6(%arg0: i32) -> (i32, i32) {
    %c0_i32 = arith.constant 0 : i32
    %c0_i32_0 = arith.constant 0 : i32
    %c0_i32_1 = arith.constant 0 : i32
    return %c0_i32, %c0_i32_0 : i32, i32
  }
  func.func @transform_7(%arg0: i32) -> (i32, i32) {
    %c0_i32 = arith.constant 0 : i32
    %c0_i32_0 = arith.constant 0 : i32
    return %arg0, %c0_i32 : i32, i32
  }
}

module attributes {stable_mosaic.version = 11 : i64} {
  func.func @mlp_kernel(%arg0: i32, %arg1: memref<16x128xbf16, #tpu.memory_space<vmem>>, %arg2: memref<128x128xbf16, #tpu.memory_space<vmem>>, %arg3: memref<1x128xf32, #tpu.memory_space<vmem>>, %arg4: memref<128x128xbf16, #tpu.memory_space<vmem>>, %arg5: memref<1x128xf32, #tpu.memory_space<vmem>>, %arg6: memref<1x128xf32, #tpu.memory_space<vmem>>, %arg7: memref<1x1xf32, #tpu.memory_space<smem>>, %arg8: memref<1x16xf32, #tpu.memory_space<vmem>>) attributes {dimension_semantics = [#tpu.dimension_semantics<parallel>], iteration_bounds = array<i64: 1>, scalar_prefetch = 0 : i64, scratch_operands = 0 : i64, tpu.core_type = #tpu.core_type<tc>, window_params = [{transform_indices = @transform_0, window_bounds = array<i64: 16, 128>}, {pipeline_mode = #tpu.pipeline_mode<synchronous>, transform_indices = @transform_1, window_bounds = array<i64: 128, 128>}, {pipeline_mode = #tpu.pipeline_mode<synchronous>, transform_indices = @transform_2, window_bounds = array<i64: 1, 128>}, {pipeline_mode = #tpu.pipeline_mode<synchronous>, transform_indices = @transform_3, window_bounds = array<i64: 128, 128>}, {pipeline_mode = #tpu.pipeline_mode<synchronous>, transform_indices = @transform_4, window_bounds = array<i64: 1, 128>}, {pipeline_mode = #tpu.pipeline_mode<synchronous>, transform_indices = @transform_5, window_bounds = array<i64: 1, 128>}, {transform_indices = @transform_6, window_bounds = array<i64: 1, 1>}, {transform_indices = @transform_7, window_bounds = array<i64: 1, 16>}]} {
    %c0 = arith.constant 0 : index
    %c0_0 = arith.constant 0 : index
    %0 = vector.load %arg1[%c0, %c0_0] : memref<16x128xbf16, #tpu.memory_space<vmem>>, vector<16x128xbf16>
    %c0_1 = arith.constant 0 : index
    %c0_2 = arith.constant 0 : index
    %1 = vector.load %arg2[%c0_1, %c0_2] : memref<128x128xbf16, #tpu.memory_space<vmem>>, vector<128x128xbf16>
    %cst = arith.constant dense<0.000000e+00> : vector<16x128xf32>
    %2 = tpu.matmul %0, %1, %cst {dimension_numbers = #tpu.dot_dimension_numbers<[1], [0], [0], [1], [0, 0, 1, 1], [], []>} : vector<16x128xbf16>, vector<128x128xbf16>, vector<16x128xf32> -> vector<16x128xf32>
    %c0_3 = arith.constant 0 : index
    %c0_4 = arith.constant 0 : index
    %3 = vector.load %arg3[%c0_3, %c0_4] : memref<1x128xf32, #tpu.memory_space<vmem>>, vector<1x128xf32>
    %4 = vector.broadcast %3 : vector<1x128xf32> to vector<16x128xf32>
    %5 = arith.addf %2, %4 : vector<16x128xf32>
    %cst_5 = arith.constant 0.00999999977 : f32
    %6 = vector.broadcast %cst_5 : f32 to vector<16x128xf32>
    %7 = arith.mulf %6, %5 : vector<16x128xf32>
    %8 = arith.maximumf %5, %7 : vector<16x128xf32>
    %9 = arith.truncf %8 : vector<16x128xf32> to vector<16x128xbf16>
    %c0_6 = arith.constant 0 : index
    %c0_7 = arith.constant 0 : index
    %10 = vector.load %arg4[%c0_6, %c0_7] : memref<128x128xbf16, #tpu.memory_space<vmem>>, vector<128x128xbf16>
    %cst_8 = arith.constant dense<0.000000e+00> : vector<16x128xf32>
    %11 = tpu.matmul %9, %10, %cst_8 {dimension_numbers = #tpu.dot_dimension_numbers<[1], [0], [0], [1], [0, 0, 1, 1], [], []>} : vector<16x128xbf16>, vector<128x128xbf16>, vector<16x128xf32> -> vector<16x128xf32>
    %c0_9 = arith.constant 0 : index
    %c0_10 = arith.constant 0 : index
    %12 = vector.load %arg5[%c0_9, %c0_10] : memref<1x128xf32, #tpu.memory_space<vmem>>, vector<1x128xf32>
    %13 = vector.broadcast %12 : vector<1x128xf32> to vector<16x128xf32>
    %14 = arith.addf %11, %13 : vector<16x128xf32>
    %cst_11 = arith.constant 0.00999999977 : f32
    %15 = vector.broadcast %cst_11 : f32 to vector<16x128xf32>
    %16 = arith.mulf %15, %14 : vector<16x128xf32>
    %17 = arith.maximumf %14, %16 : vector<16x128xf32>
    %c0_12 = arith.constant 0 : index
    %c0_13 = arith.constant 0 : index
    %18 = vector.load %arg6[%c0_12, %c0_13] : memref<1x128xf32, #tpu.memory_space<vmem>>, vector<1x128xf32>
    %19 = vector.broadcast %18 : vector<1x128xf32> to vector<16x128xf32>
    %20 = arith.mulf %17, %19 : vector<16x128xf32>
    %cst_14 = arith.constant dense<0.000000e+00> : vector<16xf32>
    %21 = vector.multi_reduction <add>, %20, %cst_14 [1] : vector<16x128xf32> to vector<16xf32>
    %22 = vector.shape_cast %21 : vector<16xf32> to vector<16x1xf32>
    %c0_15 = arith.constant 0 : index
    %c0_16 = arith.constant 0 : index
    %23 = memref.load %arg7[%c0_15, %c0_16] : memref<1x1xf32, #tpu.memory_space<smem>>
    %24 = vector.broadcast %23 : f32 to vector<16x1xf32>
    %25 = arith.addf %22, %24 : vector<16x1xf32>
    %26 = vector.shape_cast %25 : vector<16x1xf32> to vector<1x16xf32>
    %c0_17 = arith.constant 0 : index
    %c0_18 = arith.constant 0 : index
    %27 = vector.load %arg8[%c0_17, %c0_18] : memref<1x16xf32, #tpu.memory_space<vmem>>, vector<1x16xf32>
    tpu.vector_store %arg8[%c0_17, %c0_18], %26 {strides = array<i32>} : memref<1x16xf32, #tpu.memory_space<vmem>>, vector<1x16xf32>,
    return
  }
  func.func @transform_0(%arg0: i32) -> (i32, i32) {
    %c0_i32 = arith.constant 0 : i32
    %c0_i32_0 = arith.constant 0 : i32
    return %arg0, %c0_i32 : i32, i32
  }
  func.func @transform_1(%arg0: i32) -> (i32, i32) {
    %c0_i32 = arith.constant 0 : i32
    %c0_i32_0 = arith.constant 0 : i32
    %c0_i32_1 = arith.constant 0 : i32
    return %c0_i32, %c0_i32_0 : i32, i32
  }
  func.func @transform_2(%arg0: i32) -> (i32, i32) {
    %c0_i32 = arith.constant 0 : i32
    %c0_i32_0 = arith.constant 0 : i32
    %c0_i32_1 = arith.constant 0 : i32
    return %c0_i32, %c0_i32_0 : i32, i32
  }
  func.func @transform_3(%arg0: i32) -> (i32, i32) {
    %c0_i32 = arith.constant 0 : i32
    %c0_i32_0 = arith.constant 0 : i32
    %c0_i32_1 = arith.constant 0 : i32
    return %c0_i32, %c0_i32_0 : i32, i32
  }
  func.func @transform_4(%arg0: i32) -> (i32, i32) {
    %c0_i32 = arith.constant 0 : i32
    %c0_i32_0 = arith.constant 0 : i32
    %c0_i32_1 = arith.constant 0 : i32
    return %c0_i32, %c0_i32_0 : i32, i32
  }
  func.func @transform_5(%arg0: i32) -> (i32, i32) {
    %c0_i32 = arith.constant 0 : i32
    %c0_i32_0 = arith.constant 0 : i32
    %c0_i32_1 = arith.constant 0 : i32
    return %c0_i32, %c0_i32_0 : i32, i32
  }
  func.func @transform_6(%arg0: i32) -> (i32, i32) {
    %c0_i32 = arith.constant 0 : i32
    %c0_i32_0 = arith.constant 0 : i32
    %c0_i32_1 = arith.constant 0 : i32
    return %c0_i32, %c0_i32_0 : i32, i32
  }
  func.func @transform_7(%arg0: i32) -> (i32, i32) {
    %c0_i32 = arith.constant 0 : i32
    %c0_i32_0 = arith.constant 0 : i32
    return %arg0, %c0_i32 : i32, i32
  }
}

</mosaic_0001>

<llo_original>
// kernel: tpu_custom_call.1
$region0: #{tpu_custom_call.1}
  #allocation0 [shape = 'u32[]', space=smem, size = 0x4, offset = 0x4, fixed_abs, tag = 'smem constant byte address 0x4 - core index']
  #allocation1 [shape = 'u32[144,128]{1,0:T(1,128)}', space=vmem, size = 0x12000, scoped, tag = 'internal scratch']
  #allocation2 [shape = 'f32[1,1]{1,0:T(1,128)S(6)}', space=smem, size = 0x200, scoped, tag = 'scoped memory for tpu_custom_call.1']
  %s0 = inlined_call_operand.hbm [shape: bf16[16,128], index: 0, kind: input, shape index: {}]
  %s1 = inlined_call_operand.hbm [shape: bf16[128,128], index: 1, kind: input, shape index: {}]
  %s2 = inlined_call_operand.vmem [shape: f32[1,128], index: 2, kind: input, shape index: {}]
  %s3 = inlined_call_operand.hbm [shape: bf16[128,128], index: 3, kind: input, shape index: {}]
  %s4 = inlined_call_operand.vmem [shape: f32[1,128], index: 4, kind: input, shape index: {}]
  %s5 = inlined_call_operand.vmem [shape: f32[1,128], index: 5, kind: input, shape index: {}]
  %s6 = inlined_call_operand.<no memory space> [shape: f32[1,1], index: 6, kind: input, shape index: {}]
  %s7 = inlined_call_operand.hbm [shape: f32[1,16], index: 7, kind: output, shape index: {}]
  %s8 = sld [smem:[#allocation0]]
  $region50: #{tpu_custom_call.1} parent=0
    _
  %s10 = ssub.s32 1, %s8
  %s11 = scalar_select 0, %s10, %s8
  %12 = sst [smem:[#allocation2]] %s6
  $region1: #{tpu_custom_call.1} parent=0
    #allocation3 [shape = 'u8[4096]{0}', space=vmem, size = 0x1000, scoped, tag = 'input window, operand 0, single buffered']
    #allocation4 [shape = 's32[1]{0}', space=sflag, size = 0x4, scoped, tag = 'scoped memory for tpu_custom_call.1']
    #allocation5 [shape = 's32[1]{0}', space=sflag, size = 0x4, scoped, tag = 'scoped memory for tpu_custom_call.1']
    #allocation6 [shape = 'u8[32768]{0}', space=vmem, size = 0x8000, scoped, tag = 'input window, operand 1, single buffered']
    #allocation7 [shape = 's32[1]{0}', space=sflag, size = 0x4, scoped, tag = 'scoped memory for tpu_custom_call.1']
    #allocation8 [shape = 'u8[32768]{0}', space=vmem, size = 0x8000, scoped, tag = 'input window, operand 3, single buffered']
    #allocation9 [shape = 'u8[512]{0}', space=vmem, size = 0x400, scoped, tag = 'output window, operand 0, single buffered']
    %13 = vsyncpa [#allocation4], 0
    %14 = vsyncpa [#allocation7], 0
    %15 = vsyncpa [#allocation5], 0
    // Predicated region
    $region2: #{tpu_custom_call.1} parent=1 // pred_check
      _
    $region3: #{tpu_custom_call.1} parent=1 // pred_check_branch
      %17 = sbr.rel (0) target = $region5
    $region4: #{tpu_custom_call.1} parent=1 // pred_region
      %s19 = ssub.s32 128, 128
      %20 = vsyncadd [#allocation4], %s19
      %s21 = sshll.u32 [#allocation3], 4
      %s22 = int_to_ptr.vmem [resolvable:$true] %s21
      %27 = dma.hbm_to_vmem [thread:$0]  %s0, 128, %s22, [#allocation4], 64, 64, 4
    $region5: #{tpu_custom_call.1} parent=1 // pred_fallthru
      _
    // Predicated region
    $region6: #{tpu_custom_call.1} parent=1 // pred_check
      _
    $region7: #{tpu_custom_call.1} parent=1 // pred_check_branch
      %29 = sbr.rel (0) target = $region9
    $region8: #{tpu_custom_call.1} parent=1 // pred_region
      %s31 = ssub.s32 1024, 1024
      %32 = vsyncadd [#allocation7], %s31
      %s33 = sshll.u32 [#allocation6], 4
      %s34 = int_to_ptr.vmem [resolvable:$true] %s33
      %39 = dma.hbm_to_vmem [thread:$0]  %s1, 1024, %s34, [#allocation7], 64, 64, 4
    $region9: #{tpu_custom_call.1} parent=1 // pred_fallthru
      _
    // Predicated region
    $region10: #{tpu_custom_call.1} parent=1 // pred_check
      _
    $region11: #{tpu_custom_call.1} parent=1 // pred_check_branch
      %41 = sbr.rel (0) target = $region13
    $region12: #{tpu_custom_call.1} parent=1 // pred_region
      _
    $region13: #{tpu_custom_call.1} parent=1 // pred_fallthru
      _
    // Predicated region
    $region14: #{tpu_custom_call.1} parent=1 // pred_check
      _
    $region15: #{tpu_custom_call.1} parent=1 // pred_check_branch
      %43 = sbr.rel (0) target = $region17
    $region16: #{tpu_custom_call.1} parent=1 // pred_region
      %s45 = ssub.s32 1024, 1024
      %46 = vsyncadd [#allocation7], %s45
      %s47 = sshll.u32 [#allocation8], 4
      %s48 = int_to_ptr.vmem [resolvable:$true] %s47
      %53 = dma.hbm_to_vmem [thread:$0]  %s3, 1024, %s48, [#allocation7], 64, 64, 4
    $region17: #{tpu_custom_call.1} parent=1 // pred_fallthru
      _
    // Predicated region
    $region18: #{tpu_custom_call.1} parent=1 // pred_check
      _
    $region19: #{tpu_custom_call.1} parent=1 // pred_check_branch
      %55 = sbr.rel (0) target = $region21
    $region20: #{tpu_custom_call.1} parent=1 // pred_region
      _
    $region21: #{tpu_custom_call.1} parent=1 // pred_fallthru
      _
    // Predicated region
    $region22: #{tpu_custom_call.1} parent=1 // pred_check
      _
    $region23: #{tpu_custom_call.1} parent=1 // pred_check_branch
      %57 = sbr.rel (0) target = $region25
    $region24: #{tpu_custom_call.1} parent=1 // pred_region
      _
    $region25: #{tpu_custom_call.1} parent=1 // pred_fallthru
      _
    // Predicated region
    $region26: #{tpu_custom_call.1} parent=1 // pred_check
      _
    $region27: #{tpu_custom_call.1} parent=1 // pred_check_branch
      %59 = sbr.rel (0) target = $region29
    $region28: #{tpu_custom_call.1} parent=1 // pred_region
      _
    $region29: #{tpu_custom_call.1} parent=1 // pred_fallthru
      _
    // Predicated region
    $region30: #{tpu_custom_call.1} parent=1 // pred_check
      _
    $region31: #{tpu_custom_call.1} parent=1 // pred_check_branch
      %61 = sbr.rel (0) target = $region33
    $region32: #{tpu_custom_call.1} parent=1 // pred_region
      %62 = dma.done [#allocation4], 128
    $region33: #{tpu_custom_call.1} parent=1 // pred_fallthru
      _
    // Predicated region
    $region34: #{tpu_custom_call.1} parent=1 // pred_check
      _
    $region35: #{tpu_custom_call.1} parent=1 // pred_check_branch
      %64 = sbr.rel (0) target = $region37
    $region36: #{tpu_custom_call.1} parent=1 // pred_region
      %65 = dma.done [#allocation7], 1024
    $region37: #{tpu_custom_call.1} parent=1 // pred_fallthru
      _
    // Predicated region
    $region38: #{tpu_custom_call.1} parent=1 // pred_check
      _
    $region39: #{tpu_custom_call.1} parent=1 // pred_check_branch
      %67 = sbr.rel (0) target = $region41
    $region40: #{tpu_custom_call.1} parent=1 // pred_region
      %68 = dma.done [#allocation7], 1024
    $region41: #{tpu_custom_call.1} parent=1 // pred_fallthru
      _
    %v70 = vld [vmem:[#allocation3] sm:$0xf]
    %v71 = vld [vmem:[#allocation3 + $0x4] sm:$0xf]
    %v72 = vld [vmem:[#allocation6] sm:$0xf]
    %v73 = vld [vmem:[#allocation6 + $0x4] sm:$0xf]
    %v74 = vld [vmem:[#allocation6 + $0x8] sm:$0xf]
    %v75 = vld [vmem:[#allocation6 + $0xc] sm:$0xf]
    %v76 = vld [vmem:[#allocation6 + $0x10] sm:$0xf]
    %v77 = vld [vmem:[#allocation6 + $0x14] sm:$0xf]
    %v78 = vld [vmem:[#allocation6 + $0x18] sm:$0xf]
    %v79 = vld [vmem:[#allocation6 + $0x1c] sm:$0xf]
    %v80 = vld [vmem:[#allocation6 + $0x20] sm:$0xf]
    %v81 = vld [vmem:[#allocation6 + $0x24] sm:$0xf]
    %v82 = vld [vmem:[#allocation6 + $0x28] sm:$0xf]
    %v83 = vld [vmem:[#allocation6 + $0x2c] sm:$0xf]
    %v84 = vld [vmem:[#allocation6 + $0x30] sm:$0xf]
    %v85 = vld [vmem:[#allocation6 + $0x34] sm:$0xf]
    %v86 = vld [vmem:[#allocation6 + $0x38] sm:$0xf]
    %v87 = vld [vmem:[#allocation6 + $0x3c] sm:$0xf]
    %v88 = vld [vmem:[%s2] sm:$0x1]
    %v90 = vlaneseq
    %v91 = vshrl.u32 %v90, 7
    %v92 = vsub.s32 0, %v91
    %v93 = vrot.slane %v88, %v92
    %v97 = vunpack.c.l.b16 %v70
    %v98 = vunpack.c.l.b16 %v71
    %v99 = vpack.c.b16 %v98, %v97
    %v117 = vunpack.c.l.b16 %v72
    %v118 = vunpack.c.l.b16 %v73
    %v119 = vunpack.c.l.b16 %v74
    %v120 = vunpack.c.l.b16 %v75
    %v121 = vunpack.c.l.b16 %v76
    %v122 = vunpack.c.l.b16 %v77
    %v123 = vunpack.c.l.b16 %v78
    %v124 = vunpack.c.l.b16 %v79
    %v125 = vunpack.c.l.b16 %v80
    %v126 = vunpack.c.l.b16 %v81
    %v127 = vunpack.c.l.b16 %v82
    %v128 = vunpack.c.l.b16 %v83
    %v129 = vunpack.c.l.b16 %v84
    %v130 = vunpack.c.l.b16 %v85
    %v131 = vunpack.c.l.b16 %v86
    %v132 = vunpack.c.l.b16 %v87
    %v133 = vpack.c.b16 %v118, %v117
    %v134 = vpack.c.b16 %v120, %v119
    %v135 = vpack.c.b16 %v122, %v121
    %v136 = vpack.c.b16 %v124, %v123
    %v137 = vpack.c.b16 %v126, %v125
    %v138 = vpack.c.b16 %v128, %v127
    %v139 = vpack.c.b16 %v130, %v129
    %v140 = vpack.c.b16 %v132, %v131
    %149 = vmatprep.subr.bf16.mxu0 0
    %150 = vmatpush1.bf16.msra.mxu0 %v140
    %151 = vmatprep.subr.bf16.mxu0 0
    %152 = vmatpush1.bf16.msra.mxu0 %v139
    %153 = vmatprep.subr.bf16.mxu0 0
    %154 = vmatpush1.bf16.msra.mxu0 %v138
    %155 = vmatprep.subr.bf16.mxu0 0
    %156 = vmatpush1.bf16.msra.mxu0 %v137
    %157 = vmatprep.subr.bf16.mxu0 0
    %158 = vmatpush1.bf16.msra.mxu0 %v136
    %159 = vmatprep.subr.bf16.mxu0 0
    %160 = vmatpush1.bf16.msra.mxu0 %v135
    %161 = vmatprep.subr.bf16.mxu0 0
    %162 = vmatpush1.bf16.msra.mxu0 %v134
    %163 = vmatprep.subr.bf16.mxu0 0
    %164 = vmatpush1.bf16.msra.mxu0 %v133
    %165 = vmatprep.subr.bf16.mxu0 0
    %166 = vmatpush2.bf16.msra.mxu0 0
    %167 = vmatprep.subr.bf16.mxu0 0
    %168 = vmatpush2.bf16.msra.mxu0 0
    %169 = vmatprep.subr.bf16.mxu0 0
    %170 = vmatpush2.bf16.msra.mxu0 0
    %171 = vmatprep.subr.bf16.mxu0 0
    %172 = vmatpush2.bf16.msra.mxu0 0
    %173 = vmatprep.subr.bf16.mxu0 0
    %174 = vmatpush2.bf16.msra.mxu0 0
    %175 = vmatprep.subr.bf16.mxu0 0
    %176 = vmatpush2.bf16.msra.mxu0 0
    %177 = vmatprep.subr.bf16.mxu0 0
    %178 = vmatpush2.bf16.msra.mxu0 0
    %179 = vmatprep.subr.bf16.mxu0 0
    %180 = vmatpush2.bf16.msra.mxu0 0
    %181 = vmatprep.mubr.bf16.mxu0 0
    %182 = vmatmul.mubr.bf16.gmra.mxu0 %v99
    %v183 = vpop.f32.mrf.mxu0
    %v184 = vadd.f32 %v93, %v183
    %v185 = vpop.f32.mrf.mxu0
    %v186 = vpop.f32.mrf.mxu0
    %v187 = vadd.f32 %v93, %v186
    %v188 = vpop.f32.mrf.mxu0
    %189 = vdwg.mxu0
    %v190 = vmul.f32 %v184, 0.01
    %v191 = vmul.f32 %v187, 0.01
    %v192 = vmax.f32 %v184, %v190
    %v193 = vmax.f32 %v187, %v191
    %v194 = vpack.c.bf16 %v193, %v192
    %v195 = vld [vmem:[#allocation8] sm:$0xf]
    %v196 = vld [vmem:[#allocation8 + $0x4] sm:$0xf]
    %v197 = vld [vmem:[#allocation8 + $0x8] sm:$0xf]
    %v198 = vld [vmem:[#allocation8 + $0xc] sm:$0xf]
    %v199 = vld [vmem:[#allocation8 + $0x10] sm:$0xf]
    %v200 = vld [vmem:[#allocation8 + $0x14] sm:$0xf]
    %v201 = vld [vmem:[#allocation8 + $0x18] sm:$0xf]
    %v202 = vld [vmem:[#allocation8 + $0x1c] sm:$0xf]
    %v203 = vld [vmem:[#allocation8 + $0x20] sm:$0xf]
    %v204 = vld [vmem:[#allocation8 + $0x24] sm:$0xf]
    %v205 = vld [vmem:[#allocation8 + $0x28] sm:$0xf]
    %v206 = vld [vmem:[#allocation8 + $0x2c] sm:$0xf]
    %v207 = vld [vmem:[#allocation8 + $0x30] sm:$0xf]
    %v208 = vld [vmem:[#allocation8 + $0x34] sm:$0xf]
    %v209 = vld [vmem:[#allocation8 + $0x38] sm:$0xf]
    %v210 = vld [vmem:[#allocation8 + $0x3c] sm:$0xf]
    %v211 = vld [vmem:[%s4] sm:$0x1]
    %v213 = vlaneseq
    %v214 = vshrl.u32 %v213, 7
    %v215 = vsub.s32 0, %v214
    %v216 = vrot.slane %v211, %v215
    %v234 = vunpack.c.l.b16 %v195
    %v235 = vunpack.c.l.b16 %v196
    %v236 = vunpack.c.l.b16 %v197
    %v237 = vunpack.c.l.b16 %v198
    %v238 = vunpack.c.l.b16 %v199
    %v239 = vunpack.c.l.b16 %v200
    %v240 = vunpack.c.l.b16 %v201
    %v241 = vunpack.c.l.b16 %v202
    %v242 = vunpack.c.l.b16 %v203
    %v243 = vunpack.c.l.b16 %v204
    %v244 = vunpack.c.l.b16 %v205
    %v245 = vunpack.c.l.b16 %v206
    %v246 = vunpack.c.l.b16 %v207
    %v247 = vunpack.c.l.b16 %v208
    %v248 = vunpack.c.l.b16 %v209
    %v249 = vunpack.c.l.b16 %v210
    %v250 = vpack.c.b16 %v235, %v234
    %v251 = vpack.c.b16 %v237, %v236
    %v252 = vpack.c.b16 %v239, %v238
    %v253 = vpack.c.b16 %v241, %v240
    %v254 = vpack.c.b16 %v243, %v242
    %v255 = vpack.c.b16 %v245, %v244
    %v256 = vpack.c.b16 %v247, %v246
    %v257 = vpack.c.b16 %v249, %v248
    %266 = vmatprep.subr.bf16.mxu0 0
    %267 = vmatpush1.bf16.msra.mxu0 %v257
    %268 = vmatprep.subr.bf16.mxu0 0
    %269 = vmatpush1.bf16.msra.mxu0 %v256
    %270 = vmatprep.subr.bf16.mxu0 0
    %271 = vmatpush1.bf16.msra.mxu0 %v255
    %272 = vmatprep.subr.bf16.mxu0 0
    %273 = vmatpush1.bf16.msra.mxu0 %v254
    %274 = vmatprep.subr.bf16.mxu0 0
    %275 = vmatpush1.bf16.msra.mxu0 %v253
    %276 = vmatprep.subr.bf16.mxu0 0
    %277 = vmatpush1.bf16.msra.mxu0 %v252
    %278 = vmatprep.subr.bf16.mxu0 0
    %279 = vmatpush1.bf16.msra.mxu0 %v251
    %280 = vmatprep.subr.bf16.mxu0 0
    %281 = vmatpush1.bf16.msra.mxu0 %v250
    %282 = vmatprep.subr.bf16.mxu0 0
    %283 = vmatpush2.bf16.msra.mxu0 0
    %284 = vmatprep.subr.bf16.mxu0 0
    %285 = vmatpush2.bf16.msra.mxu0 0
    %286 = vmatprep.subr.bf16.mxu0 0
    %287 = vmatpush2.bf16.msra.mxu0 0
    %288 = vmatprep.subr.bf16.mxu0 0
    %289 = vmatpush2.bf16.msra.mxu0 0
    %290 = vmatprep.subr.bf16.mxu0 0
    %291 = vmatpush2.bf16.msra.mxu0 0
    %292 = vmatprep.subr.bf16.mxu0 0
    %293 = vmatpush2.bf16.msra.mxu0 0
    %294 = vmatprep.subr.bf16.mxu0 0
    %295 = vmatpush2.bf16.msra.mxu0 0
    %296 = vmatprep.subr.bf16.mxu0 0
    %297 = vmatpush2.bf16.msra.mxu0 0
    %298 = vmatprep.mubr.bf16.mxu0 0
    %299 = vmatmul.mubr.bf16.gmra.mxu0 %v194
    %v300 = vpop.f32.mrf.mxu0
    %v301 = vadd.f32 %v216, %v300
    %v302 = vpop.f32.mrf.mxu0
    %v303 = vpop.f32.mrf.mxu0
    %v304 = vadd.f32 %v216, %v303
    %v305 = vpop.f32.mrf.mxu0
    %306 = vdwg.mxu0
    %v307 = vmul.f32 %v301, 0.01
    %v308 = vmul.f32 %v304, 0.01
    %v309 = vmax.f32 %v301, %v307
    %v310 = vmax.f32 %v304, %v308
    %v311 = vld [vmem:[%s5] sm:$0x1]
    %v313 = vlaneseq
    %v314 = vshrl.u32 %v313, 7
    %v315 = vsub.s32 0, %v314
    %v316 = vrot.slane %v311, %v315
    %v318 = vmul.f32 %v309, %v316
    %v319 = vmul.f32 %v310, %v316
    %320 = vadd.xlane.f32.xlu0 %v318
    %v321 = vpop.xlane.xlu0 %320
    %322 = vadd.xlane.f32.xlu0 %v319
    %v323 = vpop.xlane.xlu0 %322
    %s324 = sld [smem:[#allocation2]]
    %v325 = vstv %s324
    %v326 = vadd.f32 %v321, %v325
    %v327 = vadd.f32 %v323, %v325
    %v330 = vlaneseq
    %v331 = vand.u32 %v330, 127
    %v332 = vlaneseq
    %v333 = vshrl.u32 %v332, 7
    %v334 = vsub.s32 %v331, %v333
    %v335 = vrot.slane %v326, %v334
    %v336 = vadd.s32 %v331, 4294967288
    %v337 = vlaneseq
    %v338 = vshrl.u32 %v337, 7
    %v339 = vsub.s32 %v336, %v338
    %v340 = vrot.slane %v327, %v339
    %vm341 = vcmask 130112
    %v342 = vsel %vm341, %v340, %v335
    %vm344 = vcmask 122880
    %345 = vst.msk [vmem:[#allocation9] sm:$0x1] %vm344, %v342
    // Predicated region
    $region42: #{tpu_custom_call.1} parent=1 // pred_check
      _
    $region43: #{tpu_custom_call.1} parent=1 // pred_check_branch
      %347 = sbr.rel (0) target = $region45
    $region44: #{tpu_custom_call.1} parent=1 // pred_region
      %s349 = ssub.s32 16, 16
      %350 = vsyncadd [#allocation5], %s349
      %s352 = sshll.u32 [#allocation9], 4
      %s353 = int_to_ptr.vmem [resolvable:$true] %s352
      %355 = dma.vmem_to_hbm [thread:$0]  %s353, 16, %s7, [#allocation5]
    $region45: #{tpu_custom_call.1} parent=1 // pred_fallthru
      _
    // Predicated region
    $region46: #{tpu_custom_call.1} parent=1 // pred_check
      _
    $region47: #{tpu_custom_call.1} parent=1 // pred_check_branch
      %357 = sbr.rel (0) target = $region49
    $region48: #{tpu_custom_call.1} parent=1 // pred_region
      %358 = dma.done [#allocation5], 16
    $region49: #{tpu_custom_call.1} parent=1 // pred_fallthru
      _
    %359 = vsyncpa [#allocation4], 1
    %360 = vsyncpa [#allocation7], 1
    %361 = vsyncpa [#allocation5], 1

// kernel: tpu_custom_call.1
$region0: #{tpu_custom_call.1}
  #allocation0 [shape = 'u32[]', space=smem, size = 0x4, offset = 0x4, fixed_abs, tag = 'smem constant byte address 0x4 - core index']
  #allocation1 [shape = 'u32[144,128]{1,0:T(1,128)}', space=vmem, size = 0x12000, scoped, tag = 'internal scratch']
  #allocation2 [shape = 'f32[1,1]{1,0:T(1,128)S(6)}', space=smem, size = 0x200, scoped, tag = 'scoped memory for tpu_custom_call.1']
  %s0 = inlined_call_operand.hbm [shape: bf16[16,128], index: 0, kind: input, shape index: {}]
  %s1 = inlined_call_operand.hbm [shape: bf16[128,128], index: 1, kind: input, shape index: {}]
  %s2 = inlined_call_operand.vmem [shape: f32[1,128], index: 2, kind: input, shape index: {}]
  %s3 = inlined_call_operand.hbm [shape: bf16[128,128], index: 3, kind: input, shape index: {}]
  %s4 = inlined_call_operand.vmem [shape: f32[1,128], index: 4, kind: input, shape index: {}]
  %s5 = inlined_call_operand.vmem [shape: f32[1,128], index: 5, kind: input, shape index: {}]
  %s6 = inlined_call_operand.<no memory space> [shape: f32[1,1], index: 6, kind: input, shape index: {}]
  %s7 = inlined_call_operand.hbm [shape: f32[1,16], index: 7, kind: output, shape index: {}]
  %s8 = sld [smem:[#allocation0]]
  $region50: #{tpu_custom_call.1} parent=0
    _
  %s10 = ssub.s32 1, %s8
  %s11 = scalar_select 0, %s10, %s8
  %12 = sst [smem:[#allocation2]] %s6
  $region1: #{tpu_custom_call.1} parent=0
    #allocation3 [shape = 'u8[4096]{0}', space=vmem, size = 0x1000, scoped, tag = 'input window, operand 0, single buffered']
    #allocation4 [shape = 's32[1]{0}', space=sflag, size = 0x4, scoped, tag = 'scoped memory for tpu_custom_call.1']
    #allocation5 [shape = 's32[1]{0}', space=sflag, size = 0x4, scoped, tag = 'scoped memory for tpu_custom_call.1']
    #allocation6 [shape = 'u8[32768]{0}', space=vmem, size = 0x8000, scoped, tag = 'input window, operand 1, single buffered']
    #allocation7 [shape = 's32[1]{0}', space=sflag, size = 0x4, scoped, tag = 'scoped memory for tpu_custom_call.1']
    #allocation8 [shape = 'u8[32768]{0}', space=vmem, size = 0x8000, scoped, tag = 'input window, operand 3, single buffered']
    #allocation9 [shape = 'u8[512]{0}', space=vmem, size = 0x400, scoped, tag = 'output window, operand 0, single buffered']
    %13 = vsyncpa [#allocation4], 0
    %14 = vsyncpa [#allocation7], 0
    %15 = vsyncpa [#allocation5], 0
    // Predicated region
    $region2: #{tpu_custom_call.1} parent=1 // pred_check
      _
    $region3: #{tpu_custom_call.1} parent=1 // pred_check_branch
      %17 = sbr.rel (0) target = $region5
    $region4: #{tpu_custom_call.1} parent=1 // pred_region
      %s19 = ssub.s32 128, 128
      %20 = vsyncadd [#allocation4], %s19
      %s21 = sshll.u32 [#allocation3], 4
      %s22 = int_to_ptr.vmem [resolvable:$true] %s21
      %27 = dma.hbm_to_vmem [thread:$0]  %s0, 128, %s22, [#allocation4], 64, 64, 4
    $region5: #{tpu_custom_call.1} parent=1 // pred_fallthru
      _
    // Predicated region
    $region6: #{tpu_custom_call.1} parent=1 // pred_check
      _
    $region7: #{tpu_custom_call.1} parent=1 // pred_check_branch
      %29 = sbr.rel (0) target = $region9
    $region8: #{tpu_custom_call.1} parent=1 // pred_region
      %s31 = ssub.s32 1024, 1024
      %32 = vsyncadd [#allocation7], %s31
      %s33 = sshll.u32 [#allocation6], 4
      %s34 = int_to_ptr.vmem [resolvable:$true] %s33
      %39 = dma.hbm_to_vmem [thread:$0]  %s1, 1024, %s34, [#allocation7], 64, 64, 4
    $region9: #{tpu_custom_call.1} parent=1 // pred_fallthru
      _
    // Predicated region
    $region10: #{tpu_custom_call.1} parent=1 // pred_check
      _
    $region11: #{tpu_custom_call.1} parent=1 // pred_check_branch
      %41 = sbr.rel (0) target = $region13
    $region12: #{tpu_custom_call.1} parent=1 // pred_region
      _
    $region13: #{tpu_custom_call.1} parent=1 // pred_fallthru
      _
    // Predicated region
    $region14: #{tpu_custom_call.1} parent=1 // pred_check
      _
    $region15: #{tpu_custom_call.1} parent=1 // pred_check_branch
      %43 = sbr.rel (0) target = $region17
    $region16: #{tpu_custom_call.1} parent=1 // pred_region
      %s45 = ssub.s32 1024, 1024
      %46 = vsyncadd [#allocation7], %s45
      %s47 = sshll.u32 [#allocation8], 4
      %s48 = int_to_ptr.vmem [resolvable:$true] %s47
      %53 = dma.hbm_to_vmem [thread:$0]  %s3, 1024, %s48, [#allocation7], 64, 64, 4
    $region17: #{tpu_custom_call.1} parent=1 // pred_fallthru
      _
    // Predicated region
    $region18: #{tpu_custom_call.1} parent=1 // pred_check
      _
    $region19: #{tpu_custom_call.1} parent=1 // pred_check_branch
      %55 = sbr.rel (0) target = $region21
    $region20: #{tpu_custom_call.1} parent=1 // pred_region
      _
    $region21: #{tpu_custom_call.1} parent=1 // pred_fallthru
      _
    // Predicated region
    $region22: #{tpu_custom_call.1} parent=1 // pred_check
      _
    $region23: #{tpu_custom_call.1} parent=1 // pred_check_branch
      %57 = sbr.rel (0) target = $region25
    $region24: #{tpu_custom_call.1} parent=1 // pred_region
      _
    $region25: #{tpu_custom_call.1} parent=1 // pred_fallthru
      _
    // Predicated region
    $region26: #{tpu_custom_call.1} parent=1 // pred_check
      _
    $region27: #{tpu_custom_call.1} parent=1 // pred_check_branch
      %59 = sbr.rel (0) target = $region29
    $region28: #{tpu_custom_call.1} parent=1 // pred_region
      _
    $region29: #{tpu_custom_call.1} parent=1 // pred_fallthru
      _
    // Predicated region
    $region30: #{tpu_custom_call.1} parent=1 // pred_check
      _
    $region31: #{tpu_custom_call.1} parent=1 // pred_check_branch
      %61 = sbr.rel (0) target = $region33
    $region32: #{tpu_custom_call.1} parent=1 // pred_region
      %62 = dma.done [#allocation4], 128
    $region33: #{tpu_custom_call.1} parent=1 // pred_fallthru
      _
    // Predicated region
    $region34: #{tpu_custom_call.1} parent=1 // pred_check
      _
    $region35: #{tpu_custom_call.1} parent=1 // pred_check_branch
      %64 = sbr.rel (0) target = $region37
    $region36: #{tpu_custom_call.1} parent=1 // pred_region
      %65 = dma.done [#allocation7], 1024
    $region37: #{tpu_custom_call.1} parent=1 // pred_fallthru
      _
    // Predicated region
    $region38: #{tpu_custom_call.1} parent=1 // pred_check
      _
    $region39: #{tpu_custom_call.1} parent=1 // pred_check_branch
      %67 = sbr.rel (0) target = $region41
    $region40: #{tpu_custom_call.1} parent=1 // pred_region
      %68 = dma.done [#allocation7], 1024
    $region41: #{tpu_custom_call.1} parent=1 // pred_fallthru
      _
    %v70 = vld [vmem:[#allocation3] sm:$0xf]
    %v71 = vld [vmem:[#allocation3 + $0x4] sm:$0xf]
    %v72 = vld [vmem:[#allocation6] sm:$0xf]
    %v73 = vld [vmem:[#allocation6 + $0x4] sm:$0xf]
    %v74 = vld [vmem:[#allocation6 + $0x8] sm:$0xf]
    %v75 = vld [vmem:[#allocation6 + $0xc] sm:$0xf]
    %v76 = vld [vmem:[#allocation6 + $0x10] sm:$0xf]
    %v77 = vld [vmem:[#allocation6 + $0x14] sm:$0xf]
    %v78 = vld [vmem:[#allocation6 + $0x18] sm:$0xf]
    %v79 = vld [vmem:[#allocation6 + $0x1c] sm:$0xf]
    %v80 = vld [vmem:[#allocation6 + $0x20] sm:$0xf]
    %v81 = vld [vmem:[#allocation6 + $0x24] sm:$0xf]
    %v82 = vld [vmem:[#allocation6 + $0x28] sm:$0xf]
    %v83 = vld [vmem:[#allocation6 + $0x2c] sm:$0xf]
    %v84 = vld [vmem:[#allocation6 + $0x30] sm:$0xf]
    %v85 = vld [vmem:[#allocation6 + $0x34] sm:$0xf]
    %v86 = vld [vmem:[#allocation6 + $0x38] sm:$0xf]
    %v87 = vld [vmem:[#allocation6 + $0x3c] sm:$0xf]
    %v88 = vld [vmem:[%s2] sm:$0x1]
    %v90 = vlaneseq
    %v91 = vshrl.u32 %v90, 7
    %v92 = vsub.s32 0, %v91
    %v93 = vrot.slane %v88, %v92
    %v97 = vunpack.c.l.b16 %v70
    %v98 = vunpack.c.l.b16 %v71
    %v99 = vpack.c.b16 %v98, %v97
    %v117 = vunpack.c.l.b16 %v72
    %v118 = vunpack.c.l.b16 %v73
    %v119 = vunpack.c.l.b16 %v74
    %v120 = vunpack.c.l.b16 %v75
    %v121 = vunpack.c.l.b16 %v76
    %v122 = vunpack.c.l.b16 %v77
    %v123 = vunpack.c.l.b16 %v78
    %v124 = vunpack.c.l.b16 %v79
    %v125 = vunpack.c.l.b16 %v80
    %v126 = vunpack.c.l.b16 %v81
    %v127 = vunpack.c.l.b16 %v82
    %v128 = vunpack.c.l.b16 %v83
    %v129 = vunpack.c.l.b16 %v84
    %v130 = vunpack.c.l.b16 %v85
    %v131 = vunpack.c.l.b16 %v86
    %v132 = vunpack.c.l.b16 %v87
    %v133 = vpack.c.b16 %v118, %v117
    %v134 = vpack.c.b16 %v120, %v119
    %v135 = vpack.c.b16 %v122, %v121
    %v136 = vpack.c.b16 %v124, %v123
    %v137 = vpack.c.b16 %v126, %v125
    %v138 = vpack.c.b16 %v128, %v127
    %v139 = vpack.c.b16 %v130, %v129
    %v140 = vpack.c.b16 %v132, %v131
    %149 = vmatprep.subr.bf16.mxu0 0
    %150 = vmatpush1.bf16.msra.mxu0 %v140
    %151 = vmatprep.subr.bf16.mxu0 0
    %152 = vmatpush1.bf16.msra.mxu0 %v139
    %153 = vmatprep.subr.bf16.mxu0 0
    %154 = vmatpush1.bf16.msra.mxu0 %v138
    %155 = vmatprep.subr.bf16.mxu0 0
    %156 = vmatpush1.bf16.msra.mxu0 %v137
    %157 = vmatprep.subr.bf16.mxu0 0
    %158 = vmatpush1.bf16.msra.mxu0 %v136
    %159 = vmatprep.subr.bf16.mxu0 0
    %160 = vmatpush1.bf16.msra.mxu0 %v135
    %161 = vmatprep.subr.bf16.mxu0 0
    %162 = vmatpush1.bf16.msra.mxu0 %v134
    %163 = vmatprep.subr.bf16.mxu0 0
    %164 = vmatpush1.bf16.msra.mxu0 %v133
    %165 = vmatprep.subr.bf16.mxu0 0
    %166 = vmatpush2.bf16.msra.mxu0 0
    %167 = vmatprep.subr.bf16.mxu0 0
    %168 = vmatpush2.bf16.msra.mxu0 0
    %169 = vmatprep.subr.bf16.mxu0 0
    %170 = vmatpush2.bf16.msra.mxu0 0
    %171 = vmatprep.subr.bf16.mxu0 0
    %172 = vmatpush2.bf16.msra.mxu0 0
    %173 = vmatprep.subr.bf16.mxu0 0
    %174 = vmatpush2.bf16.msra.mxu0 0
    %175 = vmatprep.subr.bf16.mxu0 0
    %176 = vmatpush2.bf16.msra.mxu0 0
    %177 = vmatprep.subr.bf16.mxu0 0
    %178 = vmatpush2.bf16.msra.mxu0 0
    %179 = vmatprep.subr.bf16.mxu0 0
    %180 = vmatpush2.bf16.msra.mxu0 0
    %181 = vmatprep.mubr.bf16.mxu0 0
    %182 = vmatmul.mubr.bf16.gmra.mxu0 %v99
    %v183 = vpop.f32.mrf.mxu0
    %v184 = vadd.f32 %v93, %v183
    %v185 = vpop.f32.mrf.mxu0
    %v186 = vpop.f32.mrf.mxu0
    %v187 = vadd.f32 %v93, %v186
    %v188 = vpop.f32.mrf.mxu0
    %189 = vdwg.mxu0
    %v190 = vmul.f32 %v184, 0.01
    %v191 = vmul.f32 %v187, 0.01
    %v192 = vmax.f32 %v184, %v190
    %v193 = vmax.f32 %v187, %v191
    %v194 = vpack.c.bf16 %v193, %v192
    %v195 = vld [vmem:[#allocation8] sm:$0xf]
    %v196 = vld [vmem:[#allocation8 + $0x4] sm:$0xf]
    %v197 = vld [vmem:[#allocation8 + $0x8] sm:$0xf]
    %v198 = vld [vmem:[#allocation8 + $0xc] sm:$0xf]
    %v199 = vld [vmem:[#allocation8 + $0x10] sm:$0xf]
    %v200 = vld [vmem:[#allocation8 + $0x14] sm:$0xf]
    %v201 = vld [vmem:[#allocation8 + $0x18] sm:$0xf]
    %v202 = vld [vmem:[#allocation8 + $0x1c] sm:$0xf]
    %v203 = vld [vmem:[#allocation8 + $0x20] sm:$0xf]
    %v204 = vld [vmem:[#allocation8 + $0x24] sm:$0xf]
    %v205 = vld [vmem:[#allocation8 + $0x28] sm:$0xf]
    %v206 = vld [vmem:[#allocation8 + $0x2c] sm:$0xf]
    %v207 = vld [vmem:[#allocation8 + $0x30] sm:$0xf]
    %v208 = vld [vmem:[#allocation8 + $0x34] sm:$0xf]
    %v209 = vld [vmem:[#allocation8 + $0x38] sm:$0xf]
    %v210 = vld [vmem:[#allocation8 + $0x3c] sm:$0xf]
    %v211 = vld [vmem:[%s4] sm:$0x1]
    %v213 = vlaneseq
    %v214 = vshrl.u32 %v213, 7
    %v215 = vsub.s32 0, %v214
    %v216 = vrot.slane %v211, %v215
    %v234 = vunpack.c.l.b16 %v195
    %v235 = vunpack.c.l.b16 %v196
    %v236 = vunpack.c.l.b16 %v197
    %v237 = vunpack.c.l.b16 %v198
    %v238 = vunpack.c.l.b16 %v199
    %v239 = vunpack.c.l.b16 %v200
    %v240 = vunpack.c.l.b16 %v201
    %v241 = vunpack.c.l.b16 %v202
    %v242 = vunpack.c.l.b16 %v203
    %v243 = vunpack.c.l.b16 %v204
    %v244 = vunpack.c.l.b16 %v205
    %v245 = vunpack.c.l.b16 %v206
    %v246 = vunpack.c.l.b16 %v207
    %v247 = vunpack.c.l.b16 %v208
    %v248 = vunpack.c.l.b16 %v209
    %v249 = vunpack.c.l.b16 %v210
    %v250 = vpack.c.b16 %v235, %v234
    %v251 = vpack.c.b16 %v237, %v236
    %v252 = vpack.c.b16 %v239, %v238
    %v253 = vpack.c.b16 %v241, %v240
    %v254 = vpack.c.b16 %v243, %v242
    %v255 = vpack.c.b16 %v245, %v244
    %v256 = vpack.c.b16 %v247, %v246
    %v257 = vpack.c.b16 %v249, %v248
    %266 = vmatprep.subr.bf16.mxu0 0
    %267 = vmatpush1.bf16.msra.mxu0 %v257
    %268 = vmatprep.subr.bf16.mxu0 0
    %269 = vmatpush1.bf16.msra.mxu0 %v256
    %270 = vmatprep.subr.bf16.mxu0 0
    %271 = vmatpush1.bf16.msra.mxu0 %v255
    %272 = vmatprep.subr.bf16.mxu0 0
    %273 = vmatpush1.bf16.msra.mxu0 %v254
    %274 = vmatprep.subr.bf16.mxu0 0
    %275 = vmatpush1.bf16.msra.mxu0 %v253
    %276 = vmatprep.subr.bf16.mxu0 0
    %277 = vmatpush1.bf16.msra.mxu0 %v252
    %278 = vmatprep.subr.bf16.mxu0 0
    %279 = vmatpush1.bf16.msra.mxu0 %v251
    %280 = vmatprep.subr.bf16.mxu0 0
    %281 = vmatpush1.bf16.msra.mxu0 %v250
    %282 = vmatprep.subr.bf16.mxu0 0
    %283 = vmatpush2.bf16.msra.mxu0 0
    %284 = vmatprep.subr.bf16.mxu0 0
    %285 = vmatpush2.bf16.msra.mxu0 0
    %286 = vmatprep.subr.bf16.mxu0 0
    %287 = vmatpush2.bf16.msra.mxu0 0
    %288 = vmatprep.subr.bf16.mxu0 0
    %289 = vmatpush2.bf16.msra.mxu0 0
    %290 = vmatprep.subr.bf16.mxu0 0
    %291 = vmatpush2.bf16.msra.mxu0 0
    %292 = vmatprep.subr.bf16.mxu0 0
    %293 = vmatpush2.bf16.msra.mxu0 0
    %294 = vmatprep.subr.bf16.mxu0 0
    %295 = vmatpush2.bf16.msra.mxu0 0
    %296 = vmatprep.subr.bf16.mxu0 0
    %297 = vmatpush2.bf16.msra.mxu0 0
    %298 = vmatprep.mubr.bf16.mxu0 0
    %299 = vmatmul.mubr.bf16.gmra.mxu0 %v194
    %v300 = vpop.f32.mrf.mxu0
    %v301 = vadd.f32 %v216, %v300
    %v302 = vpop.f32.mrf.mxu0
    %v303 = vpop.f32.mrf.mxu0
    %v304 = vadd.f32 %v216, %v303
    %v305 = vpop.f32.mrf.mxu0
    %306 = vdwg.mxu0
    %v307 = vmul.f32 %v301, 0.01
    %v308 = vmul.f32 %v304, 0.01
    %v309 = vmax.f32 %v301, %v307
    %v310 = vmax.f32 %v304, %v308
    %v311 = vld [vmem:[%s5] sm:$0x1]
    %v313 = vlaneseq
    %v314 = vshrl.u32 %v313, 7
    %v315 = vsub.s32 0, %v314
    %v316 = vrot.slane %v311, %v315
    %v318 = vmul.f32 %v309, %v316
    %v319 = vmul.f32 %v310, %v316
    %320 = vadd.xlane.f32.xlu0 %v318
    %v321 = vpop.xlane.xlu0 %320
    %322 = vadd.xlane.f32.xlu0 %v319
    %v323 = vpop.xlane.xlu0 %322
    %s324 = sld [smem:[#allocation2]]
    %v325 = vstv %s324
    %v326 = vadd.f32 %v321, %v325
    %v327 = vadd.f32 %v323, %v325
    %v330 = vlaneseq
    %v331 = vand.u32 %v330, 127
    %v332 = vlaneseq
    %v333 = vshrl.u32 %v332, 7
    %v334 = vsub.s32 %v331, %v333
    %v335 = vrot.slane %v326, %v334
    %v336 = vadd.s32 %v331, 4294967288
    %v337 = vlaneseq
    %v338 = vshrl.u32 %v337, 7
    %v339 = vsub.s32 %v336, %v338
    %v340 = vrot.slane %v327, %v339
    %vm341 = vcmask 130112
    %v342 = vsel %vm341, %v340, %v335
    %vm344 = vcmask 122880
    %345 = vst.msk [vmem:[#allocation9] sm:$0x1] %vm344, %v342
    // Predicated region
    $region42: #{tpu_custom_call.1} parent=1 // pred_check
      _
    $region43: #{tpu_custom_call.1} parent=1 // pred_check_branch
      %347 = sbr.rel (0) target = $region45
    $region44: #{tpu_custom_call.1} parent=1 // pred_region
      %s349 = ssub.s32 16, 16
      %350 = vsyncadd [#allocation5], %s349
      %s352 = sshll.u32 [#allocation9], 4
      %s353 = int_to_ptr.vmem [resolvable:$true] %s352
      %355 = dma.vmem_to_hbm [thread:$0]  %s353, 16, %s7, [#allocation5]
    $region45: #{tpu_custom_call.1} parent=1 // pred_fallthru
      _
    // Predicated region
    $region46: #{tpu_custom_call.1} parent=1 // pred_check
      _
    $region47: #{tpu_custom_call.1} parent=1 // pred_check_branch
      %357 = sbr.rel (0) target = $region49
    $region48: #{tpu_custom_call.1} parent=1 // pred_region
      %358 = dma.done [#allocation5], 16
    $region49: #{tpu_custom_call.1} parent=1 // pred_fallthru
      _
    %359 = vsyncpa [#allocation4], 1
    %360 = vsyncpa [#allocation7], 1
    %361 = vsyncpa [#allocation5], 1

</llo_original>
